<compile_context>
chip_gen: v7x
topology: tpu7x:2x2x1
jax: 0.10.0
libtpu: 0.0.40
codegen_flags: <defaults>
</compile_context>

<pallas_src>
import functools

import jax
import jax.numpy as jnp
from jax import lax
from jax.experimental import pallas as pl
from jax.experimental.pallas import tpu as pltpu


_UNROLL = 8  # samples gathered per inner-loop iteration (manual unroll)


def _round_up(n, m):
    return (n + m - 1) // m * m


def _mc_kernel(idx_ref, u_ref, v_ref, o_ref, prod_ref, *, tile_b):
    """One grid step = one tile of `tile_b` samples.

    idx_ref : SMEM (2, B_pad) int32, scalar-prefetched row/col indices.
    u_ref   : VMEM (dim1, R) f32, resident augmented factor [U.T | bias_U | 1].
    v_ref   : VMEM (dim2, R) f32, resident augmented factor [V.T | 1 | bias_V].
    o_ref   : VMEM (1, tile_b, 1) f32 output block.
    prod_ref: VMEM (tile_b, R) f32 scratch holding per-sample row products.
    """
    base = pl.program_id(0) * tile_b

    def gather_group(g, carry):
        t0 = pl.multiple_of(g * _UNROLL, _UNROLL)
        for u in range(_UNROLL):  # manual unroll: keeps scalar reads / loads pipelined
            t = t0 + u
            iu = idx_ref[0, base + t]
            iv = idx_ref[1, base + t]
            u_row = u_ref[pl.ds(iu, 1), :]          # (1, R)
            v_row = v_ref[pl.ds(iv, 1), :]          # (1, R)
            prod_ref[pl.ds(t, 1), :] = u_row * v_row
        return carry

    lax.fori_loop(0, tile_b // _UNROLL, gather_group, 0)

    # prod + b1 + b2 for every sample of the tile, as one vectorized reduction over the
    # (masked) augmented-rank lane axis. Result (tile_b, 1) matches the output block's
    # (sublane, lane) layout, so no relayout is needed for the store.
    o_ref[...] = jnp.sum(prod_ref[...], axis=1, keepdims=True)[None]


def make_augmented_factors(U_w, V_w, bias_U, bias_V):
    """Fold biases into the factors. Do this ONCE per parameter set, not per call."""
    rank, dim1 = U_w.shape
    _, dim2 = V_w.shape
    U_aug = jnp.concatenate(
        [U_w.T.astype(jnp.float32),
         bias_U.reshape(dim1, 1).astype(jnp.float32),
         jnp.ones((dim1, 1), jnp.float32)], axis=1)             # (dim1, rank+2)
    V_aug = jnp.concatenate(
        [V_w.T.astype(jnp.float32),
         jnp.ones((dim2, 1), jnp.float32),
         bias_V.reshape(dim2, 1).astype(jnp.float32)], axis=1)  # (dim2, rank+2)
    return U_aug, V_aug


def matrix_complete_forward(x, U_aug, V_aug, *, tile_b=None):
    """x: (B, 2) integer indices. Returns (B, 1) float32 (matches MatrixComplete.forward)."""
    B = x.shape[0]
    dim1, R = U_aug.shape
    dim2, R2 = V_aug.shape
    assert R == R2

    if tile_b is None:
        # >=128 samples per step (lane width), capped at 512 samples per step.
        tile_b = min(512, _round_up(max(B, 1), 128))
    assert tile_b % _UNROLL == 0
    B_pad = _round_up(max(B, 1), tile_b)
    num_tiles = B_pad // tile_b

    # Scalar-prefetch index table, padded to the tile grid (pad slots read table row 0
    # and are sliced off at the end).
    idx = jnp.zeros((2, B_pad), jnp.int32).at[:, :B].set(x.astype(jnp.int32).T)

    kernel = functools.partial(_mc_kernel, tile_b=tile_b)

    out = pl.pallas_call(
        kernel,
        out_shape=jax.ShapeDtypeStruct((num_tiles, tile_b, 1), jnp.float32),
        grid_spec=pltpu.PrefetchScalarGridSpec(
            num_scalar_prefetch=1,
            grid=(num_tiles,),
            in_specs=[
                # Full-array blocks + constant index_map -> tables stay VMEM-resident
                # (fetched once) instead of per-sample 40-byte HBM gathers.
                pl.BlockSpec((dim1, R), lambda i, idx_ref: (0, 0)),
                pl.BlockSpec((dim2, R), lambda i, idx_ref: (0, 0)),
            ],
            out_specs=pl.BlockSpec((1, tile_b, 1), lambda i, idx_ref: (i, 0, 0)),
            scratch_shapes=[pltpu.VMEM((tile_b, R), jnp.float32)],
        ),
        compiler_params=pltpu.CompilerParams(
            dimension_semantics=("parallel",),  # tiles are independent -> megacore on v7x
        ),
    )(idx, U_aug, V_aug)

    return out.reshape(B_pad, 1)[:B]


if __name__ == "__main__":
    # Small shapes consistent with the module.
    B, dim1, dim2, rank = 8, 16, 32, 8

    key = jax.random.PRNGKey(0)
    k1, k2, k3, k4, k5, k6 = jax.random.split(key, 6)

    # Deterministic synthetic parameters (shapes match nn.Linear / Parameter).
    U_w = jax.random.normal(k1, (rank, dim1), dtype=jnp.float32) * 0.1   # U.weight
    V_w = jax.random.normal(k2, (rank, dim2), dtype=jnp.float32) * 0.1   # V.weight
    bias_U = jax.random.normal(k3, (dim1,), dtype=jnp.float32)
    bias_V = jax.random.normal(k4, (dim2,), dtype=jnp.float32)

    # Input: (B, 2) integer indices.
    i1 = jax.random.randint(k5, (B, 1), 0, dim1, dtype=jnp.int32)
    i2 = jax.random.randint(k6, (B, 1), 0, dim2, dtype=jnp.int32)
    x = jnp.concatenate([i1, i2], axis=1)

    # Hoisted parameter prep (once per parameter set), jitted forward.
    U_aug, V_aug = make_augmented_factors(U_w, V_w, bias_U, bias_V)
    fwd = jax.jit(matrix_complete_forward)
    out = jax.block_until_ready(fwd(x, U_aug, V_aug))

    # Pure-JAX reference (mirrors the PyTorch forward).
    x1 = jax.nn.one_hot(x[:, 0], dim1, dtype=jnp.float32)
    x2 = jax.nn.one_hot(x[:, 1], dim2, dtype=jnp.float32)
    prod = jnp.sum((x1 @ U_w.T) * (x2 @ V_w.T), axis=-1)
    ref = (prod + x1 @ bias_U + x2 @ bias_V)[:, None]

    assert out.shape == (B, 1)
    assert jnp.allclose(out, ref, atol=1e-5, rtol=1e-5), (out, ref)

    print("KERNEL_OK")
</pallas_src>

<mosaic_0001>
module attributes {stable_mosaic.version = 11 : i64} {
  func.func @_mc_kernel(%arg0: i32, %arg1: memref<2x128xi32, #tpu.memory_space<smem>>, %arg2: memref<16x10xf32, #tpu.memory_space<vmem>>, %arg3: memref<32x10xf32, #tpu.memory_space<vmem>>, %arg4: memref<1x128x1xf32, #tpu.memory_space<vmem>>, %arg5: memref<128x10xf32, #tpu.memory_space<vmem>>) attributes {dimension_semantics = [#tpu.dimension_semantics<parallel>], iteration_bounds = array<i64: 1>, scalar_prefetch = 1 : i64, scratch_operands = 1 : i64, tpu.core_type = #tpu.core_type<tc>, window_params = [{pipeline_mode = #tpu.pipeline_mode<synchronous>, transform_indices = @transform_0, window_bounds = array<i64: 16, 10>}, {pipeline_mode = #tpu.pipeline_mode<synchronous>, transform_indices = @transform_1, window_bounds = array<i64: 32, 10>}, {transform_indices = @transform_2, window_bounds = array<i64: 1, 128, 1>}]} {
    %c128_i32 = arith.constant 128 : i32
    %0 = arith.muli %arg0, %c128_i32 : i32
    %c0_i32 = arith.constant 0 : i32
    %c16_i32 = arith.constant 16 : i32
    %1 = arith.addi %c0_i32, %c16_i32 : i32
    %c1_i32 = arith.constant 1 : i32
    scf.for %arg6 = %c0_i32 to %1 step %c1_i32  : i32 {
      %c8_i32 = arith.constant 8 : i32
      %7 = arith.muli %arg6, %c8_i32 : i32
      %8 = tpu.assume_multiple %7, 8 : i32
      %c0_i32_5 = arith.constant 0 : i32
      %9 = arith.addi %8, %c0_i32_5 : i32
      %10 = arith.addi %0, %9 : i32
      %c0_6 = arith.constant 0 : index
      %11 = arith.index_cast %10 : i32 to index
      %12 = memref.load %arg1[%c0_6, %11] : memref<2x128xi32, #tpu.memory_space<smem>>
      %13 = arith.addi %0, %9 : i32
      %c1 = arith.constant 1 : index
      %14 = arith.index_cast %13 : i32 to index
      %15 = memref.load %arg1[%c1, %14] : memref<2x128xi32, #tpu.memory_space<smem>>
      %16 = arith.index_cast %12 : i32 to index
      %c0_7 = arith.constant 0 : index
      %17 = vector.load %arg2[%16, %c0_7] : memref<16x10xf32, #tpu.memory_space<vmem>>, vector<1x10xf32>
      %18 = arith.index_cast %15 : i32 to index
      %c0_8 = arith.constant 0 : index
      %19 = vector.load %arg3[%18, %c0_8] : memref<32x10xf32, #tpu.memory_space<vmem>>, vector<1x10xf32>
      %20 = arith.mulf %17, %19 : vector<1x10xf32>
      %21 = arith.index_cast %9 : i32 to index
      %c0_9 = arith.constant 0 : index
      %22 = vector.load %arg5[%21, %c0_9] : memref<128x10xf32, #tpu.memory_space<vmem>>, vector<1x10xf32>
      tpu.vector_store %arg5[%21, %c0_9], %20 {strides = array<i32>} : memref<128x10xf32, #tpu.memory_space<vmem>>, vector<1x10xf32>,
      %c1_i32_10 = arith.constant 1 : i32
      %23 = arith.addi %8, %c1_i32_10 : i32
      %24 = arith.addi %0, %23 : i32
      %c0_11 = arith.constant 0 : index
      %25 = arith.index_cast %24 : i32 to index
      %26 = memref.load %arg1[%c0_11, %25] : memref<2x128xi32, #tpu.memory_space<smem>>
      %27 = arith.addi %0, %23 : i32
      %c1_12 = arith.constant 1 : index
      %28 = arith.index_cast %27 : i32 to index
      %29 = memref.load %arg1[%c1_12, %28] : memref<2x128xi32, #tpu.memory_space<smem>>
      %30 = arith.index_cast %26 : i32 to index
      %c0_13 = arith.constant 0 : index
      %31 = vector.load %arg2[%30, %c0_13] : memref<16x10xf32, #tpu.memory_space<vmem>>, vector<1x10xf32>
      %32 = arith.index_cast %29 : i32 to index
      %c0_14 = arith.constant 0 : index
      %33 = vector.load %arg3[%32, %c0_14] : memref<32x10xf32, #tpu.memory_space<vmem>>, vector<1x10xf32>
      %34 = arith.mulf %31, %33 : vector<1x10xf32>
      %35 = arith.index_cast %23 : i32 to index
      %c0_15 = arith.constant 0 : index
      %36 = vector.load %arg5[%35, %c0_15] : memref<128x10xf32, #tpu.memory_space<vmem>>, vector<1x10xf32>
      tpu.vector_store %arg5[%35, %c0_15], %34 {strides = array<i32>} : memref<128x10xf32, #tpu.memory_space<vmem>>, vector<1x10xf32>,
      %c2_i32 = arith.constant 2 : i32
      %37 = arith.addi %8, %c2_i32 : i32
      %38 = arith.addi %0, %37 : i32
      %c0_16 = arith.constant 0 : index
      %39 = arith.index_cast %38 : i32 to index
      %40 = memref.load %arg1[%c0_16, %39] : memref<2x128xi32, #tpu.memory_space<smem>>
      %41 = arith.addi %0, %37 : i32
      %c1_17 = arith.constant 1 : index
      %42 = arith.index_cast %41 : i32 to index
      %43 = memref.load %arg1[%c1_17, %42] : memref<2x128xi32, #tpu.memory_space<smem>>
      %44 = arith.index_cast %40 : i32 to index
      %c0_18 = arith.constant 0 : index
      %45 = vector.load %arg2[%44, %c0_18] : memref<16x10xf32, #tpu.memory_space<vmem>>, vector<1x10xf32>
      %46 = arith.index_cast %43 : i32 to index
      %c0_19 = arith.constant 0 : index
      %47 = vector.load %arg3[%46, %c0_19] : memref<32x10xf32, #tpu.memory_space<vmem>>, vector<1x10xf32>
      %48 = arith.mulf %45, %47 : vector<1x10xf32>
      %49 = arith.index_cast %37 : i32 to index
      %c0_20 = arith.constant 0 : index
      %50 = vector.load %arg5[%49, %c0_20] : memref<128x10xf32, #tpu.memory_space<vmem>>, vector<1x10xf32>
      tpu.vector_store %arg5[%49, %c0_20], %48 {strides = array<i32>} : memref<128x10xf32, #tpu.memory_space<vmem>>, vector<1x10xf32>,
      %c3_i32 = arith.constant 3 : i32
      %51 = arith.addi %8, %c3_i32 : i32
      %52 = arith.addi %0, %51 : i32
      %c0_21 = arith.constant 0 : index
      %53 = arith.index_cast %52 : i32 to index
      %54 = memref.load %arg1[%c0_21, %53] : memref<2x128xi32, #tpu.memory_space<smem>>
      %55 = arith.addi %0, %51 : i32
      %c1_22 = arith.constant 1 : index
      %56 = arith.index_cast %55 : i32 to index
      %57 = memref.load %arg1[%c1_22, %56] : memref<2x128xi32, #tpu.memory_space<smem>>
      %58 = arith.index_cast %54 : i32 to index
      %c0_23 = arith.constant 0 : index
      %59 = vector.load %arg2[%58, %c0_23] : memref<16x10xf32, #tpu.memory_space<vmem>>, vector<1x10xf32>
      %60 = arith.index_cast %57 : i32 to index
      %c0_24 = arith.constant 0 : index
      %61 = vector.load %arg3[%60, %c0_24] : memref<32x10xf32, #tpu.memory_space<vmem>>, vector<1x10xf32>
      %62 = arith.mulf %59, %61 : vector<1x10xf32>
      %63 = arith.index_cast %51 : i32 to index
      %c0_25 = arith.constant 0 : index
      %64 = vector.load %arg5[%63, %c0_25] : memref<128x10xf32, #tpu.memory_space<vmem>>, vector<1x10xf32>
      tpu.vector_store %arg5[%63, %c0_25], %62 {strides = array<i32>} : memref<128x10xf32, #tpu.memory_space<vmem>>, vector<1x10xf32>,
      %c4_i32 = arith.constant 4 : i32
      %65 = arith.addi %8, %c4_i32 : i32
      %66 = arith.addi %0, %65 : i32
      %c0_26 = arith.constant 0 : index
      %67 = arith.index_cast %66 : i32 to index
      %68 = memref.load %arg1[%c0_26, %67] : memref<2x128xi32, #tpu.memory_space<smem>>
      %69 = arith.addi %0, %65 : i32
      %c1_27 = arith.constant 1 : index
      %70 = arith.index_cast %69 : i32 to index
      %71 = memref.load %arg1[%c1_27, %70] : memref<2x128xi32, #tpu.memory_space<smem>>
      %72 = arith.index_cast %68 : i32 to index
      %c0_28 = arith.constant 0 : index
      %73 = vector.load %arg2[%72, %c0_28] : memref<16x10xf32, #tpu.memory_space<vmem>>, vector<1x10xf32>
      %74 = arith.index_cast %71 : i32 to index
      %c0_29 = arith.constant 0 : index
      %75 = vector.load %arg3[%74, %c0_29] : memref<32x10xf32, #tpu.memory_space<vmem>>, vector<1x10xf32>
      %76 = arith.mulf %73, %75 : vector<1x10xf32>
      %77 = arith.index_cast %65 : i32 to index
      %c0_30 = arith.constant 0 : index
      %78 = vector.load %arg5[%77, %c0_30] : memref<128x10xf32, #tpu.memory_space<vmem>>, vector<1x10xf32>
      tpu.vector_store %arg5[%77, %c0_30], %76 {strides = array<i32>} : memref<128x10xf32, #tpu.memory_space<vmem>>, vector<1x10xf32>,
      %c5_i32 = arith.constant 5 : i32
      %79 = arith.addi %8, %c5_i32 : i32
      %80 = arith.addi %0, %79 : i32
      %c0_31 = arith.constant 0 : index
      %81 = arith.index_cast %80 : i32 to index
      %82 = memref.load %arg1[%c0_31, %81] : memref<2x128xi32, #tpu.memory_space<smem>>
      %83 = arith.addi %0, %79 : i32
      %c1_32 = arith.constant 1 : index
      %84 = arith.index_cast %83 : i32 to index
      %85 = memref.load %arg1[%c1_32, %84] : memref<2x128xi32, #tpu.memory_space<smem>>
      %86 = arith.index_cast %82 : i32 to index
      %c0_33 = arith.constant 0 : index
      %87 = vector.load %arg2[%86, %c0_33] : memref<16x10xf32, #tpu.memory_space<vmem>>, vector<1x10xf32>
      %88 = arith.index_cast %85 : i32 to index
      %c0_34 = arith.constant 0 : index
      %89 = vector.load %arg3[%88, %c0_34] : memref<32x10xf32, #tpu.memory_space<vmem>>, vector<1x10xf32>
      %90 = arith.mulf %87, %89 : vector<1x10xf32>
      %91 = arith.index_cast %79 : i32 to index
      %c0_35 = arith.constant 0 : index
      %92 = vector.load %arg5[%91, %c0_35] : memref<128x10xf32, #tpu.memory_space<vmem>>, vector<1x10xf32>
      tpu.vector_store %arg5[%91, %c0_35], %90 {strides = array<i32>} : memref<128x10xf32, #tpu.memory_space<vmem>>, vector<1x10xf32>,
      %c6_i32 = arith.constant 6 : i32
      %93 = arith.addi %8, %c6_i32 : i32
      %94 = arith.addi %0, %93 : i32
      %c0_36 = arith.constant 0 : index
      %95 = arith.index_cast %94 : i32 to index
      %96 = memref.load %arg1[%c0_36, %95] : memref<2x128xi32, #tpu.memory_space<smem>>
      %97 = arith.addi %0, %93 : i32
      %c1_37 = arith.constant 1 : index
      %98 = arith.index_cast %97 : i32 to index
      %99 = memref.load %arg1[%c1_37, %98] : memref<2x128xi32, #tpu.memory_space<smem>>
      %100 = arith.index_cast %96 : i32 to index
      %c0_38 = arith.constant 0 : index
      %101 = vector.load %arg2[%100, %c0_38] : memref<16x10xf32, #tpu.memory_space<vmem>>, vector<1x10xf32>
      %102 = arith.index_cast %99 : i32 to index
      %c0_39 = arith.constant 0 : index
      %103 = vector.load %arg3[%102, %c0_39] : memref<32x10xf32, #tpu.memory_space<vmem>>, vector<1x10xf32>
      %104 = arith.mulf %101, %103 : vector<1x10xf32>
      %105 = arith.index_cast %93 : i32 to index
      %c0_40 = arith.constant 0 : index
      %106 = vector.load %arg5[%105, %c0_40] : memref<128x10xf32, #tpu.memory_space<vmem>>, vector<1x10xf32>
      tpu.vector_store %arg5[%105, %c0_40], %104 {strides = array<i32>} : memref<128x10xf32, #tpu.memory_space<vmem>>, vector<1x10xf32>,
      %c7_i32 = arith.constant 7 : i32
      %107 = arith.addi %8, %c7_i32 : i32
      %108 = arith.addi %0, %107 : i32
      %c0_41 = arith.constant 0 : index
      %109 = arith.index_cast %108 : i32 to index
      %110 = memref.load %arg1[%c0_41, %109] : memref<2x128xi32, #tpu.memory_space<smem>>
      %111 = arith.addi %0, %107 : i32
      %c1_42 = arith.constant 1 : index
      %112 = arith.index_cast %111 : i32 to index
      %113 = memref.load %arg1[%c1_42, %112] : memref<2x128xi32, #tpu.memory_space<smem>>
      %114 = arith.index_cast %110 : i32 to index
      %c0_43 = arith.constant 0 : index
      %115 = vector.load %arg2[%114, %c0_43] : memref<16x10xf32, #tpu.memory_space<vmem>>, vector<1x10xf32>
      %116 = arith.index_cast %113 : i32 to index
      %c0_44 = arith.constant 0 : index
      %117 = vector.load %arg3[%116, %c0_44] : memref<32x10xf32, #tpu.memory_space<vmem>>, vector<1x10xf32>
      %118 = arith.mulf %115, %117 : vector<1x10xf32>
      %119 = arith.index_cast %107 : i32 to index
      %c0_45 = arith.constant 0 : index
      %120 = vector.load %arg5[%119, %c0_45] : memref<128x10xf32, #tpu.memory_space<vmem>>, vector<1x10xf32>
      tpu.vector_store %arg5[%119, %c0_45], %118 {strides = array<i32>} : memref<128x10xf32, #tpu.memory_space<vmem>>, vector<1x10xf32>,
    }
    %c16_i32_0 = arith.constant 16 : i32
    %c0 = arith.constant 0 : index
    %c0_1 = arith.constant 0 : index
    %2 = vector.load %arg5[%c0, %c0_1] : memref<128x10xf32, #tpu.memory_space<vmem>>, vector<128x10xf32>
    %cst = arith.constant dense<0.000000e+00> : vector<128xf32>
    %3 = vector.multi_reduction <add>, %2, %cst [1] : vector<128x10xf32> to vector<128xf32>
    %4 = vector.shape_cast %3 : vector<128xf32> to vector<128x1xf32>
    %5 = vector.shape_cast %4 : vector<128x1xf32> to vector<1x128x1xf32>
    %c0_2 = arith.constant 0 : index
    %c0_3 = arith.constant 0 : index
    %c0_4 = arith.constant 0 : index
    %6 = vector.load %arg4[%c0_2, %c0_3, %c0_4] : memref<1x128x1xf32, #tpu.memory_space<vmem>>, vector<1x128x1xf32>
    tpu.vector_store %arg4[%c0_2, %c0_3, %c0_4], %5 {strides = array<i32>} : memref<1x128x1xf32, #tpu.memory_space<vmem>>, vector<1x128x1xf32>,
    return
  }
  func.func @transform_0(%arg0: i32, %arg1: memref<2x128xi32, #tpu.memory_space<smem>>) -> (i32, i32) {
    %c0_i32 = arith.constant 0 : i32
    %c0_i32_0 = arith.constant 0 : i32
    %c0_i32_1 = arith.constant 0 : i32
    return %c0_i32, %c0_i32_0 : i32, i32
  }
  func.func @transform_1(%arg0: i32, %arg1: memref<2x128xi32, #tpu.memory_space<smem>>) -> (i32, i32) {
    %c0_i32 = arith.constant 0 : i32
    %c0_i32_0 = arith.constant 0 : i32
    %c0_i32_1 = arith.constant 0 : i32
    return %c0_i32, %c0_i32_0 : i32, i32
  }
  func.func @transform_2(%arg0: i32, %arg1: memref<2x128xi32, #tpu.memory_space<smem>>) -> (i32, i32, i32) {
    %c0_i32 = arith.constant 0 : i32
    %c0_i32_0 = arith.constant 0 : i32
    %c0_i32_1 = arith.constant 0 : i32
    return %arg0, %c0_i32, %c0_i32_0 : i32, i32, i32
  }
}

</mosaic_0001>

<llo_original>
// kernel: matrix_complete_forward.1
$region0: #{matrix_complete_forward.1}
  #allocation0 [shape = 'u32[]', space=smem, size = 0x4, offset = 0x4, fixed_abs, tag = 'smem constant byte address 0x4 - core index']
  #allocation1 [shape = 'u32[144,128]{1,0:T(1,128)}', space=vmem, size = 0x12000, scoped, tag = 'internal scratch']
  #allocation2 [shape = 'f32[128,10]{1,0:T(8,128)}', space=vmem, size = 0x10000, scoped, tag = 'scratch operand']
  #allocation3 [shape = 's32[1]{0}', space=sflag, size = 0x4, scoped, tag = 'scoped memory for matrix_complete_forward.1']
  #allocation4 [shape = 'u8[1024]{0}', space=smem, size = 0x400, scoped, tag = 'prefetched SMEM operand 0']
  %s0 = inlined_call_operand.vmem [shape: s32[2,128], index: 0, kind: input, shape index: {}]
  %s1 = inlined_call_operand.vmem [shape: f32[16,10], index: 1, kind: input, shape index: {}]
  %s2 = inlined_call_operand.vmem [shape: f32[32,10], index: 2, kind: input, shape index: {}]
  %s3 = inlined_call_operand.vmem [shape: f32[1,128,1], index: 3, kind: output, shape index: {}]
  %s4 = sld [smem:[#allocation0]]
  $region25: #{matrix_complete_forward.1} parent=0
    _
  %s6 = ssub.s32 1, %s4
  %s7 = scalar_select 0, %s6, %s4
  %s8 = sshll.u32 %s0, 4
  %s9 = int_to_ptr.vmem [resolvable:$true] %s8
  %11 = dma.vmem_to_smem %s9, 32, [#allocation4], [#allocation3]
  %12 = dma.done [#allocation3], 32
  %13 = sfence
  // Predicated region
  $region2: #{matrix_complete_forward.1} parent=0 // pred_check
    _
  $region3: #{matrix_complete_forward.1} parent=0 // pred_check_branch
    %15 = sbr.rel (0) target = $region5
  $region4: #{matrix_complete_forward.1} parent=0 // pred_region
    _
  $region5: #{matrix_complete_forward.1} parent=0 // pred_fallthru
    _
  // Predicated region
  $region6: #{matrix_complete_forward.1} parent=0 // pred_check
    _
  $region7: #{matrix_complete_forward.1} parent=0 // pred_check_branch
    %17 = sbr.rel (0) target = $region9
  $region8: #{matrix_complete_forward.1} parent=0 // pred_region
    _
  $region9: #{matrix_complete_forward.1} parent=0 // pred_fallthru
    _
  %s18 = smul.u32 0, 128
  loop: start=0, step=1, limit=16
  $region10: #{matrix_complete_forward.1} parent=0 // loop_pre_header
    _
  $region11: #{matrix_complete_forward.1} parent=0 // loop_header
    %s20 = sphi 0, %s24
    %p21 = scmp.ge.s32.totalorder %s20, 16
  $region12: #{matrix_complete_forward.1} parent=0 // loop_header_branch
    %23 = sbr.rel (%p21) target = $region16
  $region13: #{matrix_complete_forward.1} parent=0 // loop_body
    %s25 = smul.u32 %s20, 8
    %s26 = sadd.s32 %s18, %s25
    %s27 = sld [smem:[#allocation4 + %s26]]
    %s28 = sshra.s32 %s26, 7
    %s29 = sand.u32 %s26, 127
    %s30 = sadd.s32 %s28, 1
    %s31 = smul.u32 %s30, 128
    %s32 = sshra.s32 %s26, 7
    %s33 = sand.u32 %s26, 127
    %s34 = sadd.s32 %s31, %s33
    %s35 = sld [smem:[#allocation4 + %s34]]
    %s36 = scalar_lea.vmem %s1, %s27
    %v37 = vld [vmem:[%s36] sm:$0x1]
    %s38 = scalar_lea.vmem %s2, %s35
    %v39 = vld [vmem:[%s38] sm:$0x1]
    %v40 = vmul.f32 %v37, %v39
    %s41 = scalar_lea.vmem [#allocation2], %s25
    %vm42 = vcmask 73728
    %43 = vst.msk [vmem:[%s41] sm:$0x1] %vm42, %v40
    %s44 = sadd.s32 %s25, 1
    %s45 = sadd.s32 %s18, %s44
    %s46 = sld [smem:[#allocation4 + %s45]]
    %s47 = sshra.s32 %s45, 7
    %s48 = sand.u32 %s45, 127
    %s49 = sadd.s32 %s47, 1
    %s50 = smul.u32 %s49, 128
    %s51 = sshra.s32 %s45, 7
    %s52 = sand.u32 %s45, 127
    %s53 = sadd.s32 %s50, %s52
    %s54 = sld [smem:[#allocation4 + %s53]]
    %s55 = scalar_lea.vmem %s1, %s46
    %v56 = vld [vmem:[%s55] sm:$0x1]
    %s57 = scalar_lea.vmem %s2, %s54
    %v58 = vld [vmem:[%s57] sm:$0x1]
    %v59 = vmul.f32 %v56, %v58
    %s60 = scalar_lea.vmem [#allocation2], %s44
    %61 = vst.msk [vmem:[%s60] sm:$0x1] %vm42, %v59
    %s62 = sadd.s32 %s25, 2
    %s63 = sadd.s32 %s18, %s62
    %s64 = sld [smem:[#allocation4 + %s63]]
    %s65 = sshra.s32 %s63, 7
    %s66 = sand.u32 %s63, 127
    %s67 = sadd.s32 %s65, 1
    %s68 = smul.u32 %s67, 128
    %s69 = sshra.s32 %s63, 7
    %s70 = sand.u32 %s63, 127
    %s71 = sadd.s32 %s68, %s70
    %s72 = sld [smem:[#allocation4 + %s71]]
    %s73 = scalar_lea.vmem %s1, %s64
    %v74 = vld [vmem:[%s73] sm:$0x1]
    %s75 = scalar_lea.vmem %s2, %s72
    %v76 = vld [vmem:[%s75] sm:$0x1]
    %v77 = vmul.f32 %v74, %v76
    %s78 = scalar_lea.vmem [#allocation2], %s62
    %79 = vst.msk [vmem:[%s78] sm:$0x1] %vm42, %v77
    %s80 = sadd.s32 %s25, 3
    %s81 = sadd.s32 %s18, %s80
    %s82 = sld [smem:[#allocation4 + %s81]]
    %s83 = sshra.s32 %s81, 7
    %s84 = sand.u32 %s81, 127
    %s85 = sadd.s32 %s83, 1
    %s86 = smul.u32 %s85, 128
    %s87 = sshra.s32 %s81, 7
    %s88 = sand.u32 %s81, 127
    %s89 = sadd.s32 %s86, %s88
    %s90 = sld [smem:[#allocation4 + %s89]]
    %s91 = scalar_lea.vmem %s1, %s82
    %v92 = vld [vmem:[%s91] sm:$0x1]
    %s93 = scalar_lea.vmem %s2, %s90
    %v94 = vld [vmem:[%s93] sm:$0x1]
    %v95 = vmul.f32 %v92, %v94
    %s96 = scalar_lea.vmem [#allocation2], %s80
    %97 = vst.msk [vmem:[%s96] sm:$0x1] %vm42, %v95
    %s98 = sadd.s32 %s25, 4
    %s99 = sadd.s32 %s18, %s98
    %s100 = sld [smem:[#allocation4 + %s99]]
    %s101 = sshra.s32 %s99, 7
    %s102 = sand.u32 %s99, 127
    %s103 = sadd.s32 %s101, 1
    %s104 = smul.u32 %s103, 128
    %s105 = sshra.s32 %s99, 7
    %s106 = sand.u32 %s99, 127
    %s107 = sadd.s32 %s104, %s106
    %s108 = sld [smem:[#allocation4 + %s107]]
    %s109 = scalar_lea.vmem %s1, %s100
    %v110 = vld [vmem:[%s109] sm:$0x1]
    %s111 = scalar_lea.vmem %s2, %s108
    %v112 = vld [vmem:[%s111] sm:$0x1]
    %v113 = vmul.f32 %v110, %v112
    %s114 = scalar_lea.vmem [#allocation2], %s98
    %115 = vst.msk [vmem:[%s114] sm:$0x1] %vm42, %v113
    %s116 = sadd.s32 %s25, 5
    %s117 = sadd.s32 %s18, %s116
    %s118 = sld [smem:[#allocation4 + %s117]]
    %s119 = sshra.s32 %s117, 7
    %s120 = sand.u32 %s117, 127
    %s121 = sadd.s32 %s119, 1
    %s122 = smul.u32 %s121, 128
    %s123 = sshra.s32 %s117, 7
    %s124 = sand.u32 %s117, 127
    %s125 = sadd.s32 %s122, %s124
    %s126 = sld [smem:[#allocation4 + %s125]]
    %s127 = scalar_lea.vmem %s1, %s118
    %v128 = vld [vmem:[%s127] sm:$0x1]
    %s129 = scalar_lea.vmem %s2, %s126
    %v130 = vld [vmem:[%s129] sm:$0x1]
    %v131 = vmul.f32 %v128, %v130
    %s132 = scalar_lea.vmem [#allocation2], %s116
    %133 = vst.msk [vmem:[%s132] sm:$0x1] %vm42, %v131
    %s134 = sadd.s32 %s25, 6
    %s135 = sadd.s32 %s18, %s134
    %s136 = sld [smem:[#allocation4 + %s135]]
    %s137 = sshra.s32 %s135, 7
    %s138 = sand.u32 %s135, 127
    %s139 = sadd.s32 %s137, 1
    %s140 = smul.u32 %s139, 128
    %s141 = sshra.s32 %s135, 7
    %s142 = sand.u32 %s135, 127
    %s143 = sadd.s32 %s140, %s142
    %s144 = sld [smem:[#allocation4 + %s143]]
    %s145 = scalar_lea.vmem %s1, %s136
    %v146 = vld [vmem:[%s145] sm:$0x1]
    %s147 = scalar_lea.vmem %s2, %s144
    %v148 = vld [vmem:[%s147] sm:$0x1]
    %v149 = vmul.f32 %v146, %v148
    %s150 = scalar_lea.vmem [#allocation2], %s134
    %151 = vst.msk [vmem:[%s150] sm:$0x1] %vm42, %v149
    %s152 = sadd.s32 %s25, 7
    %s153 = sadd.s32 %s18, %s152
    %s154 = sld [smem:[#allocation4 + %s153]]
    %s155 = sshra.s32 %s153, 7
    %s156 = sand.u32 %s153, 127
    %s157 = sadd.s32 %s155, 1
    %s158 = smul.u32 %s157, 128
    %s159 = sshra.s32 %s153, 7
    %s160 = sand.u32 %s153, 127
    %s161 = sadd.s32 %s158, %s160
    %s162 = sld [smem:[#allocation4 + %s161]]
    %s163 = scalar_lea.vmem %s1, %s154
    %v164 = vld [vmem:[%s163] sm:$0x1]
    %s165 = scalar_lea.vmem %s2, %s162
    %v166 = vld [vmem:[%s165] sm:$0x1]
    %v167 = vmul.f32 %v164, %v166
    %s168 = scalar_lea.vmem [#allocation2], %s152
    %169 = vst.msk [vmem:[%s168] sm:$0x1] %vm42, %v167
  $region14: #{matrix_complete_forward.1} parent=0 // loop_footer
    %s24 = sadd.s32 1, %s20
  $region15: #{matrix_complete_forward.1} parent=0 // loop_footer_branch
    %19 = sbr.rel target = $region11
  $region16: #{matrix_complete_forward.1} parent=0 // loop_exit
    _
  %v170 = vld [vmem:[#allocation2] sm:$0xff]
  %v171 = vld [vmem:[#allocation2 + $0x8] sm:$0xff]
  %v172 = vld [vmem:[#allocation2 + $0x10] sm:$0xff]
  %v173 = vld [vmem:[#allocation2 + $0x18] sm:$0xff]
  %v174 = vld [vmem:[#allocation2 + $0x20] sm:$0xff]
  %v175 = vld [vmem:[#allocation2 + $0x28] sm:$0xff]
  %v176 = vld [vmem:[#allocation2 + $0x30] sm:$0xff]
  %v177 = vld [vmem:[#allocation2 + $0x38] sm:$0xff]
  %v178 = vld [vmem:[#allocation2 + $0x40] sm:$0xff]
  %v179 = vld [vmem:[#allocation2 + $0x48] sm:$0xff]
  %v180 = vld [vmem:[#allocation2 + $0x50] sm:$0xff]
  %v181 = vld [vmem:[#allocation2 + $0x58] sm:$0xff]
  %v182 = vld [vmem:[#allocation2 + $0x60] sm:$0xff]
  %v183 = vld [vmem:[#allocation2 + $0x68] sm:$0xff]
  %v184 = vld [vmem:[#allocation2 + $0x70] sm:$0xff]
  %v185 = vld [vmem:[#allocation2 + $0x78] sm:$0xff]
  %vm186 = vcmask 80896
  %v187 = vsel %vm186, %v170, 0.0
  %188 = vadd.xlane.f32.xlu0 %v187
  %v189 = vpop.xlane.xlu0 %188
  %v190 = vsel %vm186, %v171, 0.0
  %191 = vadd.xlane.f32.xlu0 %v190
  %v192 = vpop.xlane.xlu0 %191
  %v193 = vsel %vm186, %v172, 0.0
  %194 = vadd.xlane.f32.xlu0 %v193
  %v195 = vpop.xlane.xlu0 %194
  %v196 = vsel %vm186, %v173, 0.0
  %197 = vadd.xlane.f32.xlu0 %v196
  %v198 = vpop.xlane.xlu0 %197
  %v199 = vsel %vm186, %v174, 0.0
  %200 = vadd.xlane.f32.xlu0 %v199
  %v201 = vpop.xlane.xlu0 %200
  %v202 = vsel %vm186, %v175, 0.0
  %203 = vadd.xlane.f32.xlu0 %v202
  %v204 = vpop.xlane.xlu0 %203
  %v205 = vsel %vm186, %v176, 0.0
  %206 = vadd.xlane.f32.xlu0 %v205
  %v207 = vpop.xlane.xlu0 %206
  %v208 = vsel %vm186, %v177, 0.0
  %209 = vadd.xlane.f32.xlu0 %v208
  %v210 = vpop.xlane.xlu0 %209
  %v211 = vsel %vm186, %v178, 0.0
  %212 = vadd.xlane.f32.xlu0 %v211
  %v213 = vpop.xlane.xlu0 %212
  %v214 = vsel %vm186, %v179, 0.0
  %215 = vadd.xlane.f32.xlu0 %v214
  %v216 = vpop.xlane.xlu0 %215
  %v217 = vsel %vm186, %v180, 0.0
  %218 = vadd.xlane.f32.xlu0 %v217
  %v219 = vpop.xlane.xlu0 %218
  %v220 = vsel %vm186, %v181, 0.0
  %221 = vadd.xlane.f32.xlu0 %v220
  %v222 = vpop.xlane.xlu0 %221
  %v223 = vsel %vm186, %v182, 0.0
  %224 = vadd.xlane.f32.xlu0 %v223
  %v225 = vpop.xlane.xlu0 %224
  %v226 = vsel %vm186, %v183, 0.0
  %227 = vadd.xlane.f32.xlu0 %v226
  %v228 = vpop.xlane.xlu0 %227
  %v229 = vsel %vm186, %v184, 0.0
  %230 = vadd.xlane.f32.xlu0 %v229
  %v231 = vpop.xlane.xlu0 %230
  %v232 = vsel %vm186, %v185, 0.0
  %233 = vadd.xlane.f32.xlu0 %v232
  %v234 = vpop.xlane.xlu0 %233
  %vm235 = vcmask 7168
  %236 = vst.msk [vmem:[%s3] sm:$0xff] %vm235, %v189
  %237 = vst.msk [vmem:[%s3 + $0x8] sm:$0xff] %vm235, %v192
  %238 = vst.msk [vmem:[%s3 + $0x10] sm:$0xff] %vm235, %v195
  %239 = vst.msk [vmem:[%s3 + $0x18] sm:$0xff] %vm235, %v198
  %240 = vst.msk [vmem:[%s3 + $0x20] sm:$0xff] %vm235, %v201
  %241 = vst.msk [vmem:[%s3 + $0x28] sm:$0xff] %vm235, %v204
  %242 = vst.msk [vmem:[%s3 + $0x30] sm:$0xff] %vm235, %v207
  %243 = vst.msk [vmem:[%s3 + $0x38] sm:$0xff] %vm235, %v210
  %244 = vst.msk [vmem:[%s3 + $0x40] sm:$0xff] %vm235, %v213
  %245 = vst.msk [vmem:[%s3 + $0x48] sm:$0xff] %vm235, %v216
  %246 = vst.msk [vmem:[%s3 + $0x50] sm:$0xff] %vm235, %v219
  %247 = vst.msk [vmem:[%s3 + $0x58] sm:$0xff] %vm235, %v222
  %248 = vst.msk [vmem:[%s3 + $0x60] sm:$0xff] %vm235, %v225
  %249 = vst.msk [vmem:[%s3 + $0x68] sm:$0xff] %vm235, %v228
  %250 = vst.msk [vmem:[%s3 + $0x70] sm:$0xff] %vm235, %v231
  %251 = vst.msk [vmem:[%s3 + $0x78] sm:$0xff] %vm235, %v234
  // Predicated region
  $region17: #{matrix_complete_forward.1} parent=0 // pred_check
    _
  $region18: #{matrix_complete_forward.1} parent=0 // pred_check_branch
    %253 = sbr.rel (0) target = $region20
  $region19: #{matrix_complete_forward.1} parent=0 // pred_region
    _
  $region20: #{matrix_complete_forward.1} parent=0 // pred_fallthru
    _
  // Predicated region
  $region21: #{matrix_complete_forward.1} parent=0 // pred_check
    _
  $region22: #{matrix_complete_forward.1} parent=0 // pred_check_branch
    %255 = sbr.rel (0) target = $region24
  $region23: #{matrix_complete_forward.1} parent=0 // pred_region
    _
  $region24: #{matrix_complete_forward.1} parent=0 // pred_fallthru
    _

</llo_original>
